<compile_context>
chip_gen: v7x
topology: tpu7x:2x2x1
jax: 0.10.0
libtpu: 0.0.40
codegen_flags: <defaults>
</compile_context>

<pallas_src>
import functools
import math

import jax
import jax.numpy as jnp
from jax.experimental import pallas as pl
from jax.experimental.pallas import tpu as pltpu


# --------------------------------------------------------------------------
# small math helpers (pure jnp -> usable both inside kernels and in the ref)
# --------------------------------------------------------------------------
def _gelu_tanh(x):
    # matches the module's GELU: 0.5*x*(1+tanh(sqrt(2/pi)*(x+0.044715*x^3)))
    c = math.sqrt(2.0 / math.pi)
    return 0.5 * x * (1.0 + jnp.tanh(c * (x + 0.044715 * x * x * x)))


def _layer_norm(x, gamma, beta, eps=1e-5):
    # nn.LayerNorm(model_dim): normalize over last dim, biased variance, affine
    mean = jnp.mean(x, axis=-1, keepdims=True)
    xc = x - mean
    var = jnp.mean(xc * xc, axis=-1, keepdims=True)
    return xc * jax.lax.rsqrt(var + eps) * gamma + beta


# --------------------------------------------------------------------------
# tiling / VMEM-budget helpers
# --------------------------------------------------------------------------
def _divisor_tile(n, cap):
    """Largest tile t dividing n with t <= cap, preferring sublane multiples of 8."""
    cap = int(max(1, min(cap, n)))
    best_any = 1
    for t in range(cap, 0, -1):
        if n % t == 0:
            if t % 8 == 0 or t == n:
                return t
            if best_any == 1:
                best_any = t
    return best_any


def _pick_activation_tile(n_rows, row_bytes, fixed_bytes=0, budget=8 << 20):
    """Largest row-tile (divisor of n_rows) whose live set fits `budget` VMEM."""
    avail = max(budget - fixed_bytes, 8 * max(row_bytes, 1))
    return _divisor_tile(n_rows, avail // max(row_bytes, 1))


def _vmem_limit(block_bytes):
    # ~3x the per-step working set (double-buffered I/O + compiler scratch),
    # clamped to a range safe on v5e (16 MiB scoped default), v6e (128 MiB
    # physical) and v7x (64 MiB physical).
    return int(min(max(3 * block_bytes + (1 << 20), 4 << 20), 48 << 20))


# --------------------------------------------------------------------------
# Kernel 1: fused Q/K/V projection — one (D, 3D) weight, grid=(B, T//tm)
# --------------------------------------------------------------------------
def _qkv_proj_kernel(x_ref, w_ref, b_ref, o_ref):
    x = x_ref[...].astype(jnp.bfloat16)          # (tm, D)  -> bf16 MXU operand
    w = w_ref[...]                               # (D, 3D)  already bf16
    y = jnp.dot(x, w, preferred_element_type=jnp.float32) + b_ref[...]
    o_ref[...] = y.astype(o_ref.dtype)           # one lane-dense (tm, 3D) store


def qkv_projection(x, wqkv, bqkv, *, out_dtype=jnp.bfloat16):
    B, T, D = x.shape
    D3 = wqkv.shape[1]
    in_b = jnp.dtype(x.dtype).itemsize
    w_b = jnp.dtype(wqkv.dtype).itemsize
    o_b = jnp.dtype(out_dtype).itemsize

    row_bytes = D * in_b + D3 * (4 + o_b)        # x row + f32 acc + out row
    fixed = D * D3 * w_b + D3 * 4                # weights + bias resident
    tm = _pick_activation_tile(T, row_bytes, fixed)
    nt = T // tm
    block_bytes = tm * row_bytes + fixed

    grid_spec = pltpu.PrefetchScalarGridSpec(
        num_scalar_prefetch=0,
        grid=(B, nt),
        in_specs=[
            pl.BlockSpec((pl.Squeezed(), tm, D), lambda b, i: (b, i, 0)),
            pl.BlockSpec((D, D3), lambda b, i: (0, 0)),
            pl.BlockSpec((1, D3), lambda b, i: (0, 0)),
        ],
        out_specs=pl.BlockSpec((pl.Squeezed(), tm, D3), lambda b, i: (b, i, 0)),
    )
    return pl.pallas_call(
        _qkv_proj_kernel,
        out_shape=jax.ShapeDtypeStruct((B, T, D3), out_dtype),
        grid_spec=grid_spec,
        compiler_params=pltpu.CompilerParams(
            dimension_semantics=("parallel", "parallel"),
            vmem_limit_bytes=_vmem_limit(block_bytes)),
    )(x, wqkv, bqkv)


# --------------------------------------------------------------------------
# Kernel 2: ScaledDotProductAttention2 — grid over (batch*heads, query tiles)
# --------------------------------------------------------------------------
def _sdpa_kernel(q_ref, k_ref, v_ref, out_ref, attn_ref, *, scale):
    q = q_ref[...]                               # (tq, Dh) bf16
    k = k_ref[...]                               # (T,  Dh) bf16
    v = v_ref[...]                               # (T,  Dh) bf16

    # scores = q @ k^T on the MXU (bf16 operands, f32 accumulation)
    s = jax.lax.dot_general(q, k, (((1,), (1,)), ((), ())),
                            preferred_element_type=jnp.float32)
    if scale:                                    # mirrors the module's `if scale:` (static)
        s = s * scale                            # f32 VPU, same op order as torch

    # TODO(synk): attn_mask (masked_fill_ with -inf) not implemented; the
    # module's default call path passes attn_mask=None, matching this kernel.

    # numerically stable softmax over the key axis (dim=2 in the module)
    s = s - jnp.max(s, axis=-1, keepdims=True)
    p = jnp.exp(s)
    attn = p * pl.reciprocal(jnp.sum(p, axis=-1, keepdims=True), approx=True)

    # write the attention tile immediately (short live range), reuse the same
    # bf16 cast for the p@v matmul.  dropout(p=0.0) is identity -> skipped.
    attn_ref[...] = attn.astype(attn_ref.dtype)
    out = jnp.dot(attn.astype(v.dtype), v, preferred_element_type=jnp.float32)
    out_ref[...] = out.astype(out_ref.dtype)


def scaled_dot_product_attention2(q, k, v, scale=None, attn_dtype=None):
    """q, k, v: [B*H, T, Dh] (bf16). Returns (output [BH,T,Dh], attn [BH,T,T])."""
    BH, T, Dh = q.shape
    assert k.shape == (BH, T, Dh) and v.shape == (BH, T, Dh)
    attn_dtype = jnp.dtype(attn_dtype if attn_dtype is not None else q.dtype)
    in_b = jnp.dtype(q.dtype).itemsize

    # VMEM-budgeted query tile: per-query-row live bytes = f32 scores + f32
    # exponentials + the attn store + the output row; K and V stay resident.
    row_bytes = T * (4 + 4 + attn_dtype.itemsize) + Dh * (4 + in_b)
    fixed = 2 * T * Dh * in_b
    tq = _pick_activation_tile(T, row_bytes, fixed)
    nq = T // tq
    block_bytes = tq * row_bytes + fixed + tq * Dh * in_b

    kernel = functools.partial(_sdpa_kernel, scale=scale)

    grid_spec = pltpu.PrefetchScalarGridSpec(
        num_scalar_prefetch=0,
        grid=(BH, nq),
        in_specs=[
            pl.BlockSpec((pl.Squeezed(), tq, Dh), lambda b, i: (b, i, 0)),
            pl.BlockSpec((pl.Squeezed(), T, Dh), lambda b, i: (b, 0, 0)),
            pl.BlockSpec((pl.Squeezed(), T, Dh), lambda b, i: (b, 0, 0)),
        ],
        out_specs=(
            pl.BlockSpec((pl.Squeezed(), tq, Dh), lambda b, i: (b, i, 0)),
            pl.BlockSpec((pl.Squeezed(), tq, T), lambda b, i: (b, i, 0)),
        ),
    )
    out_shape = (
        jax.ShapeDtypeStruct((BH, T, Dh), q.dtype),
        jax.ShapeDtypeStruct((BH, T, T), attn_dtype),
    )
    return pl.pallas_call(
        kernel,
        out_shape=out_shape,
        grid_spec=grid_spec,
        compiler_params=pltpu.CompilerParams(
            dimension_semantics=("parallel", "parallel"),
            vmem_limit_bytes=_vmem_limit(block_bytes)),
    )(q, k, v)


# --------------------------------------------------------------------------
# Kernel 3: fused MHA epilogue + FFN, grid=(B, T//tm)
#   x1  = LayerNorm(residual + context @ Wf + bf)          (linear_final, add&norm)
#   out = LayerNorm(x1 + GELU(x1 @ W1 + b1) @ W2 + b2)     (1x1-conv FFN, add&norm)
# --------------------------------------------------------------------------
def _post_attn_ffn_kernel(ctx_ref, res_ref, wf_ref, bf_ref, g1_ref, be1_ref,
                          w1_ref, b1_ref, w2_ref, b2_ref, g2_ref, be2_ref,
                          out_ref):
    ctx = ctx_ref[...]                                   # (tm, D) bf16
    res = res_ref[...].astype(jnp.float32)               # residual, f32

    # linear_final + dropout(0)=identity + add & norm
    y = jnp.dot(ctx, wf_ref[...], preferred_element_type=jnp.float32) + bf_ref[...]
    x1 = _layer_norm(res + y, g1_ref[...], be1_ref[...])

    # PositionalWiseFeedForward: Conv1d(kernel=1) == per-timestep linear
    h = jnp.dot(x1.astype(w1_ref.dtype), w1_ref[...],
                preferred_element_type=jnp.float32) + b1_ref[...]
    h = _gelu_tanh(h)
    y2 = jnp.dot(h.astype(w2_ref.dtype), w2_ref[...],
                 preferred_element_type=jnp.float32) + b2_ref[...]
    # dropout(0)=identity -> skipped
    out_ref[...] = _layer_norm(x1 + y2, g2_ref[...], be2_ref[...]).astype(out_ref.dtype)


def post_attention_ffn(context, residual, wf, bf, g1, be1, w1, b1, w2, b2, g2, be2):
    B, T, D = residual.shape
    F = w1.shape[1]
    c_b = jnp.dtype(context.dtype).itemsize
    w_b = jnp.dtype(wf.dtype).itemsize

    # per-row live bytes: ctx/res + f32 y, x1, y2 + bf16 casts + f32/bf16 hidden
    row_bytes = D * (c_b + 4 + 3 * 4 + 2) + F * (4 + 2)
    fixed = (D * D + D * F + F * D) * w_b + (4 * D + F) * 4
    tm = _pick_activation_tile(T, row_bytes, fixed)
    nt = T // tm
    block_bytes = tm * row_bytes + fixed

    act = lambda last: pl.BlockSpec((pl.Squeezed(), tm, last), lambda b, i: (b, i, 0))
    mat = lambda r, c: pl.BlockSpec((r, c), lambda b, i: (0, 0))
    vec = lambda c: pl.BlockSpec((1, c), lambda b, i: (0, 0))

    grid_spec = pltpu.PrefetchScalarGridSpec(
        num_scalar_prefetch=0,
        grid=(B, nt),
        in_specs=[
            act(D), act(D),
            mat(D, D), vec(D),          # Wf, bf
            vec(D), vec(D),             # gamma1, beta1
            mat(D, F), vec(F),          # W1, b1
            mat(F, D), vec(D),          # W2, b2
            vec(D), vec(D),             # gamma2, beta2
        ],
        out_specs=act(D),
    )
    return pl.pallas_call(
        _post_attn_ffn_kernel,
        out_shape=jax.ShapeDtypeStruct((B, T, D), residual.dtype),
        grid_spec=grid_spec,
        compiler_params=pltpu.CompilerParams(
            dimension_semantics=("parallel", "parallel"),
            vmem_limit_bytes=_vmem_limit(block_bytes)),
    )(context, residual, wf, bf, g1, be1, w1, b1, w2, b2, g2, be2)


# --------------------------------------------------------------------------
# EncoderLayer2.forward
# --------------------------------------------------------------------------
def encoder_layer2_forward(x, p, num_heads, attn_dtype=None):
    B, T, D = x.shape
    dh = D // num_heads
    attn_dtype = attn_dtype if attn_dtype is not None else x.dtype
    bf16 = jnp.bfloat16

    # Fuse Q/K/V weights -> one (D, 3D) bf16 weight / (1, 3D) f32 bias.
    wqkv = jnp.concatenate([p["wq"], p["wk"], p["wv"]], axis=1).astype(bf16)
    bqkv = jnp.concatenate([p["bq"], p["bk"], p["bv"]], axis=1).astype(jnp.float32)

    qkv = qkv_projection(x, wqkv, bqkv)          # (B, T, 3D) bf16 slab

    # exact PyTorch `.view(batch*heads, -1, dim_per_head)` semantics
    # (row-major memory reinterpretation, NOT a head-split transpose)
    q = qkv[..., 0 * D:1 * D].reshape(B * num_heads, T, dh)
    k = qkv[..., 1 * D:2 * D].reshape(B * num_heads, T, dh)
    v = qkv[..., 2 * D:3 * D].reshape(B * num_heads, T, dh)

    # quirk preserved from the module: scale uses the *viewed* key's last dim
    # with integer floor division (raises if dim_per_head < num_heads, as in torch).
    scale = (dh // num_heads) ** (-0.5)

    context_h, attn = scaled_dot_product_attention2(q, k, v, scale=scale,
                                                    attn_dtype=attn_dtype)
    context = context_h.reshape(B, T, D)

    out = post_attention_ffn(context, x,
                             p["wf"].astype(bf16), p["bf"],
                             p["g1"], p["be1"],
                             p["w1"].astype(bf16), p["b1"],
                             p["w2"].astype(bf16), p["b2"],
                             p["g2"], p["be2"])
    return out, attn


# --------------------------------------------------------------------------
# pure-JAX reference: mirrors the PyTorch forward, using the SAME numerical
# strategy as the kernels (bf16 MXU operands, fp32 accumulation) so the
# comparison isolates kernel bugs from expected MXU rounding.
# --------------------------------------------------------------------------
def _reference_encoder_layer2(x, p, num_heads):
    B, T, D = x.shape
    dh = D // num_heads
    bf16, f32 = jnp.bfloat16, jnp.float32

    def mm(a, b):
        return jnp.dot(a.astype(bf16), b.astype(bf16), preferred_element_type=f32)

    xf = x.reshape(B * T, D)
    q = (mm(xf, p["wq"]) + p["bq"]).astype(bf16)
    k = (mm(xf, p["wk"]) + p["bk"]).astype(bf16)
    v = (mm(xf, p["wv"]) + p["bv"]).astype(bf16)

    qh = q.reshape(B * num_heads, T, dh)
    kh = k.reshape(B * num_heads, T, dh)
    vh = v.reshape(B * num_heads, T, dh)

    scale = (dh // num_heads) ** (-0.5)
    s = jnp.einsum("btd,bsd->bts", qh, kh, preferred_element_type=f32)
    if scale:
        s = s * scale
    s = s - jnp.max(s, axis=2, keepdims=True)
    e = jnp.exp(s)
    attn = e / jnp.sum(e, axis=2, keepdims=True)
    ctx = jnp.einsum("bts,bsd->btd", attn.astype(bf16), vh,
                     preferred_element_type=f32).astype(bf16)
    ctx = ctx.reshape(B * T, D)

    y = mm(ctx, p["wf"]) + p["bf"]
    x1 = _layer_norm(xf + y, p["g1"], p["be1"])
    h = _gelu_tanh(mm(x1, p["w1"]) + p["b1"])
    y2 = mm(h, p["w2"]) + p["b2"]
    out = _layer_norm(x1 + y2, p["g2"], p["be2"])
    return out.reshape(B, T, D), attn


if __name__ == "__main__":
    key = jax.random.PRNGKey(0)
    keys = jax.random.split(key, 18)

    # small shapes consistent with the module:
    # batch=2, seq=8, model_dim=32, num_heads=4 (dim_per_head=8), ffn_dim=64
    B, T, D, H, F = 2, 8, 32, 4, 64

    def nrm(k, shape, s=1.0):
        return s * jax.random.normal(k, shape, dtype=jnp.float32)

    x = nrm(keys[0], (B, T, D))
    params = dict(
        wq=nrm(keys[1], (D, D), D ** -0.5), bq=nrm(keys[2], (1, D), 0.02),
        wk=nrm(keys[3], (D, D), D ** -0.5), bk=nrm(keys[4], (1, D), 0.02),
        wv=nrm(keys[5], (D, D), D ** -0.5), bv=nrm(keys[6], (1, D), 0.02),
        wf=nrm(keys[7], (D, D), D ** -0.5), bf=nrm(keys[8], (1, D), 0.02),
        g1=1.0 + nrm(keys[9], (1, D), 0.05), be1=nrm(keys[10], (1, D), 0.05),
        w1=nrm(keys[11], (D, F), D ** -0.5), b1=nrm(keys[12], (1, F), 0.02),
        w2=nrm(keys[13], (F, D), F ** -0.5), b2=nrm(keys[14], (1, D), 0.02),
        g2=1.0 + nrm(keys[15], (1, D), 0.05), be2=nrm(keys[16], (1, D), 0.05),
    )

    out, attn = encoder_layer2_forward(x, params, H)
    jax.block_until_ready((out, attn))

    out_ref, attn_ref = _reference_encoder_layer2(x, params, H)
    assert out.shape == (B, T, D) and attn.shape == (B * H, T, T)
    # tolerances sized for bf16-operand matmuls + approx reciprocal softmax
    assert jnp.allclose(attn.astype(jnp.float32), attn_ref,
                        atol=1e-2, rtol=1e-2), "attn mismatch"
    assert jnp.allclose(out.astype(jnp.float32), out_ref,
                        atol=1e-2, rtol=1e-2), "output mismatch"

    print("KERNEL_OK")
</pallas_src>

<mosaic_0001>
module attributes {stable_mosaic.version = 11 : i64} {
  func.func @_qkv_proj_kernel(%arg0: i32, %arg1: i32, %arg2: memref<1x8x32xf32, #tpu.memory_space<vmem>>, %arg3: memref<32x96xbf16, #tpu.memory_space<vmem>>, %arg4: memref<1x96xf32, #tpu.memory_space<vmem>>, %arg5: memref<1x8x96xbf16, #tpu.memory_space<vmem>>) attributes {dimension_semantics = [#tpu.dimension_semantics<parallel>, #tpu.dimension_semantics<parallel>], iteration_bounds = array<i64: 2, 1>, scalar_prefetch = 0 : i64, scratch_operands = 0 : i64, tpu.core_type = #tpu.core_type<tc>, window_params = [{transform_indices = @transform_0, window_bounds = array<i64: 1, 8, 32>}, {pipeline_mode = #tpu.pipeline_mode<synchronous>, transform_indices = @transform_1, window_bounds = array<i64: 32, 96>}, {pipeline_mode = #tpu.pipeline_mode<synchronous>, transform_indices = @transform_2, window_bounds = array<i64: 1, 96>}, {transform_indices = @transform_3, window_bounds = array<i64: 1, 8, 96>}]} {
    %c0 = arith.constant 0 : index
    %c0_0 = arith.constant 0 : index
    %c0_1 = arith.constant 0 : index
    %0 = vector.load %arg2[%c0, %c0_0, %c0_1] : memref<1x8x32xf32, #tpu.memory_space<vmem>>, vector<1x8x32xf32>
    %1 = vector.shape_cast %0 : vector<1x8x32xf32> to vector<8x32xf32>
    %2 = arith.truncf %1 : vector<8x32xf32> to vector<8x32xbf16>
    %c0_2 = arith.constant 0 : index
    %c0_3 = arith.constant 0 : index
    %3 = vector.load %arg3[%c0_2, %c0_3] : memref<32x96xbf16, #tpu.memory_space<vmem>>, vector<32x96xbf16>
    %cst = arith.constant dense<0.000000e+00> : vector<8x96xf32>
    %4 = tpu.matmul %2, %3, %cst {dimension_numbers = #tpu.dot_dimension_numbers<[1], [0], [0], [1], [0, 0, 1, 1], [], []>} : vector<8x32xbf16>, vector<32x96xbf16>, vector<8x96xf32> -> vector<8x96xf32>
    %c0_4 = arith.constant 0 : index
    %c0_5 = arith.constant 0 : index
    %5 = vector.load %arg4[%c0_4, %c0_5] : memref<1x96xf32, #tpu.memory_space<vmem>>, vector<1x96xf32>
    %6 = vector.broadcast %5 : vector<1x96xf32> to vector<8x96xf32>
    %7 = arith.addf %4, %6 : vector<8x96xf32>
    %8 = arith.truncf %7 : vector<8x96xf32> to vector<8x96xbf16>
    %c0_6 = arith.constant 0 : index
    %c0_7 = arith.constant 0 : index
    %c0_8 = arith.constant 0 : index
    %9 = vector.load %arg5[%c0_6, %c0_7, %c0_8] : memref<1x8x96xbf16, #tpu.memory_space<vmem>>, vector<1x8x96xbf16>
    %10 = vector.shape_cast %9 : vector<1x8x96xbf16> to vector<8x96xbf16>
    %11 = vector.shape_cast %8 : vector<8x96xbf16> to vector<1x8x96xbf16>
    tpu.vector_store %arg5[%c0_6, %c0_7, %c0_8], %11 {strides = array<i32>} : memref<1x8x96xbf16, #tpu.memory_space<vmem>>, vector<1x8x96xbf16>,
    return
  }
  func.func @transform_0(%arg0: i32, %arg1: i32) -> (i32, i32, i32) {
    %c0_i32 = arith.constant 0 : i32
    %c0_i32_0 = arith.constant 0 : i32
    return %arg0, %arg1, %c0_i32 : i32, i32, i32
  }
  func.func @transform_1(%arg0: i32, %arg1: i32) -> (i32, i32) {
    %c0_i32 = arith.constant 0 : i32
    %c0_i32_0 = arith.constant 0 : i32
    %c0_i32_1 = arith.constant 0 : i32
    return %c0_i32, %c0_i32_0 : i32, i32
  }
  func.func @transform_2(%arg0: i32, %arg1: i32) -> (i32, i32) {
    %c0_i32 = arith.constant 0 : i32
    %c0_i32_0 = arith.constant 0 : i32
    %c0_i32_1 = arith.constant 0 : i32
    return %c0_i32, %c0_i32_0 : i32, i32
  }
  func.func @transform_3(%arg0: i32, %arg1: i32) -> (i32, i32, i32) {
    %c0_i32 = arith.constant 0 : i32
    %c0_i32_0 = arith.constant 0 : i32
    return %arg0, %arg1, %c0_i32 : i32, i32, i32
  }
}

</mosaic_0001>

<llo_original>
// kernel: tpu_custom_call.1
$region0: #{tpu_custom_call.1}
  #allocation0 [shape = 'u32[]', space=smem, size = 0x4, offset = 0x4, fixed_abs, tag = 'smem constant byte address 0x4 - core index']
  #allocation1 [shape = 'u32[144,128]{1,0:T(1,128)}', space=vmem, size = 0x12000, scoped, tag = 'internal scratch']
  %s0 = inlined_call_operand.hbm [shape: f32[2,8,32], index: 0, kind: input, shape index: {}]
  %s1 = inlined_call_operand.hbm [shape: bf16[32,96], index: 1, kind: input, shape index: {}]
  %s2 = inlined_call_operand.vmem [shape: f32[1,96], index: 2, kind: input, shape index: {}]
  %s3 = inlined_call_operand.hbm [shape: bf16[2,8,96], index: 3, kind: output, shape index: {}]
  %s4 = sld [smem:[#allocation0]]
  $region53: #{tpu_custom_call.1} parent=0
    _
  %s6 = ssub.s32 1, %s4
  %s7 = scalar_select 0, %s6, %s4
  $region1: #{tpu_custom_call.1} parent=0
    #allocation2 [shape = 'u8[8192]{0}', space=vmem, size = 0x2000, scoped, tag = 'input window, operand 0']
    #allocation3 [shape = 's32[2]{0}', space=sflag, size = 0x8, scoped, tag = 'scoped memory for tpu_custom_call.1']
    #allocation4 [shape = 's32[2]{0}', space=sflag, size = 0x8, scoped, tag = 'scoped memory for tpu_custom_call.1']
    #allocation5 [shape = 'u8[8192]{0}', space=vmem, size = 0x2000, scoped, tag = 'input window, operand 1, single buffered']
    #allocation6 [shape = 's32[1]{0}', space=sflag, size = 0x4, scoped, tag = 'scoped memory for tpu_custom_call.1']
    #allocation7 [shape = 'u8[4096]{0}', space=vmem, size = 0x1000, scoped, tag = 'output window, operand 0']
    %8 = vsyncpa [#allocation3], 0
    %s9 = scalar_lea.sflag [#allocation3], 1
    %10 = vsyncpa %s9, 0
    %11 = vsyncpa [#allocation6], 0
    %12 = vsyncpa [#allocation4], 0
    %s13 = scalar_lea.sflag [#allocation4], 1
    %14 = vsyncpa %s13, 0
    loop: start=0, step=1, limit=4
    $region2: #{tpu_custom_call.1} parent=1 // loop_pre_header
      _
    $region3: #{tpu_custom_call.1} parent=1 // loop_header
      %s16 = sphi 0, %s20
      %p17 = scmp.ge.s32.totalorder %s16, 4
      %s23 = sphi 0, %s35
      %s24 = sphi 0, %s31
      %s25 = sphi 0, %s23
      %s26 = sphi 0, %s24
      %s27 = sphi 0, %s25
      %s28 = sphi 0, %s26
      %s40 = sphi 0, %s42
      %s43 = sphi 0, %s40
      %s44 = sphi 0, %s43
      %s60 = sphi 0, %s44
      %s64 = sphi 0, %s64
      %s66 = sphi 0, %s64
      %s67 = sphi 0, %s66
      %s81 = sphi 0, %s67
      %s85 = sphi 0, %s85
      %s87 = sphi 0, %s85
      %s88 = sphi 0, %s87
      %s102 = sphi 0, %s88
      %s110 = sphi 0, %s112
      %s113 = sphi 0, %s110
      %s114 = sphi 0, %s113
      %s130 = sphi 0, %s114
    $region4: #{tpu_custom_call.1} parent=1 // loop_header_branch
      %19 = sbr.rel (%p17) target = $region8
    $region5: #{tpu_custom_call.1} parent=1 // loop_body
      %s21 = ssub.s32 %s16, 1
      %s22 = ssub.s32 %s16, 2
      %s29 = sadd.s32 1, %s24
      %p30 = scmp.ge.s32.totalorder %s29, 1
      %s31 = scalar_select %p30, 0, %s29
      %s32 = sadd.s32 1, %s23
      %s33 = scalar_select %p30, %s32, %s23
      %p34 = scmp.ge.s32.totalorder %s33, 2
      %s35 = scalar_select %p34, 0, %s33
      %s36 = ssub.s32 %s23, %s35
      %s37 = ssub.s32 %s24, %s31
      %s38 = sor.u32 %s36, %s37
      %p39 = scmp.eq.s32.totalorder %s38, 0
      %s41 = sadd.s32 %s40, 1
      %s42 = scalar_select %p39, %s40, %s41
      %p45 = pneg %p39
      %p46 = scmp.eq.s32.totalorder %s16, 1
      %p47 = por %p45, %p46
      %p48 = scmp.ne.s32.totalorder %s40, %s43
      %p49 = scmp.eq.s32.totalorder %s16, 0
      %p50 = por %p48, %p49
      %p51 = scmp.ne.s32.totalorder %s40, %s43
      %p52 = scmp.eq.s32.totalorder %s21, 1
      %p53 = por %p51, %p52
      %p54 = scmp.ne.s32.totalorder %s43, %s44
      %p55 = scmp.eq.s32.totalorder %s21, 0
      %p56 = por %p54, %p55
      %p57 = scmp.ne.s32.totalorder %s43, %s44
      %p58 = scmp.eq.s32.totalorder %s22, 1
      %p59 = por %p57, %p58
      %p61 = scmp.ne.s32.totalorder %s44, %s60
      %p62 = scmp.eq.s32.totalorder %s22, 0
      %p63 = por %p61, %p62
      %s65 = sadd.s32 %s64, 1
      %p68 = scmp.eq.s32.totalorder %s16, 1
      %p69 = scmp.ne.s32.totalorder %s64, %s66
      %p70 = scmp.eq.s32.totalorder %s16, 0
      %p71 = por %p69, %p70
      %p72 = scmp.ne.s32.totalorder %s64, %s66
      %p73 = scmp.eq.s32.totalorder %s21, 1
      %p74 = por %p72, %p73
      %p75 = scmp.ne.s32.totalorder %s66, %s67
      %p76 = scmp.eq.s32.totalorder %s21, 0
      %p77 = por %p75, %p76
      %p78 = scmp.ne.s32.totalorder %s66, %s67
      %p79 = scmp.eq.s32.totalorder %s22, 1
      %p80 = por %p78, %p79
      %p82 = scmp.ne.s32.totalorder %s67, %s81
      %p83 = scmp.eq.s32.totalorder %s22, 0
      %p84 = por %p82, %p83
      %s86 = sadd.s32 %s85, 1
      %p89 = scmp.eq.s32.totalorder %s16, 1
      %p90 = scmp.ne.s32.totalorder %s85, %s87
      %p91 = scmp.eq.s32.totalorder %s16, 0
      %p92 = por %p90, %p91
      %p93 = scmp.ne.s32.totalorder %s85, %s87
      %p94 = scmp.eq.s32.totalorder %s21, 1
      %p95 = por %p93, %p94
      %p96 = scmp.ne.s32.totalorder %s87, %s88
      %p97 = scmp.eq.s32.totalorder %s21, 0
      %p98 = por %p96, %p97
      %p99 = scmp.ne.s32.totalorder %s87, %s88
      %p100 = scmp.eq.s32.totalorder %s22, 1
      %p101 = por %p99, %p100
      %p103 = scmp.ne.s32.totalorder %s88, %s102
      %p104 = scmp.eq.s32.totalorder %s22, 0
      %p105 = por %p103, %p104
      %s106 = ssub.s32 %s23, %s35
      %s107 = ssub.s32 %s24, %s31
      %s108 = sor.u32 %s106, %s107
      %p109 = scmp.eq.s32.totalorder %s108, 0
      %s111 = sadd.s32 %s110, 1
      %s112 = scalar_select %p109, %s110, %s111
      %p115 = pneg %p109
      %p116 = scmp.eq.s32.totalorder %s16, 1
      %p117 = por %p115, %p116
      %p118 = scmp.ne.s32.totalorder %s110, %s113
      %p119 = scmp.eq.s32.totalorder %s16, 0
      %p120 = por %p118, %p119
      %p121 = scmp.ne.s32.totalorder %s110, %s113
      %p122 = scmp.eq.s32.totalorder %s21, 1
      %p123 = por %p121, %p122
      %p124 = scmp.ne.s32.totalorder %s113, %s114
      %p125 = scmp.eq.s32.totalorder %s21, 0
      %p126 = por %p124, %p125
      %p127 = scmp.ne.s32.totalorder %s113, %s114
      %p128 = scmp.eq.s32.totalorder %s22, 1
      %p129 = por %p127, %p128
      %p131 = scmp.ne.s32.totalorder %s114, %s130
      %p132 = scmp.eq.s32.totalorder %s22, 0
      %p133 = por %p131, %p132
      %p134 = scmp.le.s32.totalorder 1, %s16
      %p135 = scmp.lt.s32.totalorder %s16, 3
      %p136 = pnand %p134, %p135
      %p137 = pneg %p136
      // Predicated region
      $region9: #{tpu_custom_call.1} parent=5 // pred_check
        _
      $region10: #{tpu_custom_call.1} parent=5 // pred_check_branch
        %139 = sbr.rel (%p136) target = $region12
      $region11: #{tpu_custom_call.1} parent=5 // pred_region
        %s140 = ssub.s32 %s16, 1
        // Predicated region
        $region13: #{tpu_custom_call.1} parent=11 // pred_check
          %p141 = pneg %p77
        $region14: #{tpu_custom_call.1} parent=11 // pred_check_branch
          %143 = sbr.rel (%p141) target = $region16
        $region15: #{tpu_custom_call.1} parent=11 // pred_region
          %s145 = ssub.s32 256, 256
          %146 = vsyncadd [#allocation6], %s145
          %s147 = sshll.u32 [#allocation5], 4
          %s148 = int_to_ptr.vmem [resolvable:$true] %s147
          %153 = dma.hbm_to_vmem [thread:$0]  %s1, 256, %s148, [#allocation6], 64, 64, 4
        $region16: #{tpu_custom_call.1} parent=11 // pred_fallthru
          _
        // Predicated region
        $region17: #{tpu_custom_call.1} parent=11 // pred_check
          %p154 = pneg %p98
        $region18: #{tpu_custom_call.1} parent=11 // pred_check_branch
          %156 = sbr.rel (%p154) target = $region20
        $region19: #{tpu_custom_call.1} parent=11 // pred_region
          _
        $region20: #{tpu_custom_call.1} parent=11 // pred_fallthru
          _
      $region12: #{tpu_custom_call.1} parent=5 // pred_fallthru
        _
      %p157 = scmp.lt.s32.totalorder %s16, 2
      // Predicated region
      $region21: #{tpu_custom_call.1} parent=5 // pred_check
        %p158 = pneg %p157
      $region22: #{tpu_custom_call.1} parent=5 // pred_check_branch
        %160 = sbr.rel (%p158) target = $region24
      $region23: #{tpu_custom_call.1} parent=5 // pred_region
        // Predicated region
        $region25: #{tpu_custom_call.1} parent=23 // pred_check
          %p161 = pneg %p50
        $region26: #{tpu_custom_call.1} parent=23 // pred_check_branch
          %163 = sbr.rel (%p161) target = $region28
        $region27: #{tpu_custom_call.1} parent=23 // pred_region
          %s164 = sand.u32 %s40, 1
          %s165 = scalar_lea.sflag [#allocation3], %s164
          %s166 = sand.u32 %s40, 1
          %s167 = smul.addr %s166, 8
          %s168 = scalar_lea.vmem [#allocation2], %s167
          %s170 = ssub.s32 128, 128
          %171 = vsyncadd %s165, %s170
          %s172 = sadd.s32 %s24, %s23
          %s173 = smul.addr %s172, 128
          %s174 = scalar_lea.hbm %s0, %s173
          %s176 = sshll.u32 %s168, 4
          %s177 = int_to_ptr.vmem [resolvable:$true] %s176
          %179 = dma.hbm_to_vmem [thread:$0]  %s174, 128, %s177, %s165
        $region28: #{tpu_custom_call.1} parent=23 // pred_fallthru
          _
      $region24: #{tpu_custom_call.1} parent=5 // pred_fallthru
        _
      %p180 = scmp.le.s32.totalorder 1, %s16
      %p181 = scmp.lt.s32.totalorder %s16, 3
      %p182 = pnand %p180, %p181
      %p183 = pneg %p182
      // Predicated region
      $region29: #{tpu_custom_call.1} parent=5 // pred_check
        _
      $region30: #{tpu_custom_call.1} parent=5 // pred_check_branch
        %185 = sbr.rel (%p182) target = $region32
      $region31: #{tpu_custom_call.1} parent=5 // pred_region
        %s186 = ssub.s32 %s16, 1
        %s187 = sand.u32 %s43, 1
        %s188 = scalar_lea.sflag [#allocation3], %s187
        %s189 = sand.u32 %s43, 1
        %s190 = smul.addr %s189, 8
        %s191 = scalar_lea.vmem [#allocation2], %s190
        // Predicated region
        $region33: #{tpu_custom_call.1} parent=31 // pred_check
          %p192 = pneg %p56
        $region34: #{tpu_custom_call.1} parent=31 // pred_check_branch
          %194 = sbr.rel (%p192) target = $region36
        $region35: #{tpu_custom_call.1} parent=31 // pred_region
          %195 = dma.done %s188, 128
        $region36: #{tpu_custom_call.1} parent=31 // pred_fallthru
          _
        // Predicated region
        $region37: #{tpu_custom_call.1} parent=31 // pred_check
          %p196 = pneg %p77
        $region38: #{tpu_custom_call.1} parent=31 // pred_check_branch
          %198 = sbr.rel (%p196) target = $region40
        $region39: #{tpu_custom_call.1} parent=31 // pred_region
          %199 = dma.done [#allocation6], 256
        $region40: #{tpu_custom_call.1} parent=31 // pred_fallthru
          _
        %s200 = sand.u32 %s43, 1
        %s201 = scalar_lea.sflag [#allocation3], %s200
        %s202 = sand.u32 %s43, 1
        %s203 = smul.addr %s202, 8
        %s204 = scalar_lea.vmem [#allocation2], %s203
        %p205 = pneg %p56
        %p206 = pneg %p53
        %p207 = pneg %p77
        %p208 = pneg %p74
        %p209 = pneg %p98
        %p210 = pneg %p95
        %p211 = pneg %p126
        %p212 = pneg %p123
        %s213 = sand.u32 %s113, 1
        %s214 = scalar_lea.sflag [#allocation4], %s213
        %s215 = sand.u32 %s113, 1
        %s216 = smul.addr %s215, 4
        %s217 = scalar_lea.vmem [#allocation7], %s216
        %v219 = vld [vmem:[%s191] sm:$0xff]
        %v220 = vpack.c.bf16 %v219, %v219
        %v221 = vld [vmem:[#allocation5] sm:$0xf]
        %v222 = vld [vmem:[#allocation5 + $0x4] sm:$0xf]
        %v223 = vld [vmem:[#allocation5 + $0x8] sm:$0xf]
        %v224 = vld [vmem:[#allocation5 + $0xc] sm:$0xf]
        %v225 = vld [vmem:[%s2] sm:$0x1]
        %v227 = vlaneseq
        %v228 = vshrl.u32 %v227, 7
        %v229 = vsub.s32 0, %v228
        %v230 = vrot.slane %v225, %v229
        %v236 = vunpack.c.l.b16 %v221
        %v237 = vunpack.c.l.b16 %v222
        %v238 = vunpack.c.l.b16 %v223
        %v239 = vunpack.c.l.b16 %v224
        %v240 = vpack.c.b16 %v237, %v236
        %v241 = vpack.c.b16 %v239, %v238
        %vm244 = vcmask 261120
        %v246 = vsel %vm244, %v220, 0
        %248 = vmatprep.subr.bf16.mxu0 0
        %249 = vmatpush1.bf16.msra.mxu0 %v240
        %250 = vmatprep.subr.bf16.mxu0 0
        %251 = vmatpush1.bf16.msra.mxu0 %v241
        %252 = vmatprep.subr.bf16.mxu0 0
        %253 = vmatpush1.bf16.msra.mxu0 0
        %254 = vmatprep.subr.bf16.mxu0 0
        %255 = vmatpush1.bf16.msra.mxu0 0
        %256 = vmatprep.subr.bf16.mxu0 0
        %257 = vmatpush1.bf16.msra.mxu0 0
        %258 = vmatprep.subr.bf16.mxu0 0
        %259 = vmatpush1.bf16.msra.mxu0 0
        %260 = vmatprep.subr.bf16.mxu0 0
        %261 = vmatpush1.bf16.msra.mxu0 0
        %262 = vmatprep.subr.bf16.mxu0 0
        %263 = vmatpush1.bf16.msra.mxu0 0
        %264 = vmatprep.subr.bf16.mxu0 0
        %265 = vmatpush1.bf16.msra.mxu0 0
        %266 = vmatprep.subr.bf16.mxu0 0
        %267 = vmatpush1.bf16.msra.mxu0 0
        %268 = vmatprep.subr.bf16.mxu0 0
        %269 = vmatpush1.bf16.msra.mxu0 0
        %270 = vmatprep.subr.bf16.mxu0 0
        %271 = vmatpush1.bf16.msra.mxu0 0
        %272 = vmatprep.subr.bf16.mxu0 0
        %273 = vmatpush1.bf16.msra.mxu0 0
        %274 = vmatprep.subr.bf16.mxu0 0
        %275 = vmatpush1.bf16.msra.mxu0 0
        %276 = vmatprep.subr.bf16.mxu0 0
        %277 = vmatpush1.bf16.msra.mxu0 0
        %278 = vmatprep.subr.bf16.mxu0 0
        %279 = vmatpush1.bf16.msra.mxu0 0
        %280 = vmatprep.mubr.bf16.mxu0 0
        %281 = vmatmul.mubr.bf16.gmra.mrb[0].mxu0 %v246
        %v282 = vpop.f32.mrb[0].mxu0
        %v283 = vadd.f32 %v230, %v282
        %v284 = vpop.f32.mrb[0].mxu0
        %v285 = vpop.f32.mrb[0].mxu0
        %v286 = vpop.f32.mrb[0].mxu0
        %287 = vdwg.mxu0
        %v288 = vpack.c.bf16 %v283, %v283
        %vm289 = vcmask 781312
        %290 = vst.msk [vmem:[%s217] sm:$0xf] %vm289, %v288
        %s291 = sand.u32 %s113, 1
        %s292 = scalar_lea.sflag [#allocation4], %s291
        %s293 = sand.u32 %s113, 1
        %s294 = smul.addr %s293, 4
        %s295 = scalar_lea.vmem [#allocation7], %s294
        // Predicated region
        $region41: #{tpu_custom_call.1} parent=31 // pred_check
          %p296 = pneg %p123
        $region42: #{tpu_custom_call.1} parent=31 // pred_check_branch
          %298 = sbr.rel (%p296) target = $region44
        $region43: #{tpu_custom_call.1} parent=31 // pred_region
          %s300 = ssub.s32 64, 64
          %301 = vsyncadd %s292, %s300
          %s302 = sadd.s32 %s26, %s25
          %s303 = smul.addr %s302, 64
          %s304 = scalar_lea.hbm %s3, %s303
          %s306 = sshll.u32 %s295, 4
          %s307 = int_to_ptr.vmem [resolvable:$true] %s306
          %309 = dma.vmem_to_hbm [thread:$0]  %s307, 64, %s304, %s292
        $region44: #{tpu_custom_call.1} parent=31 // pred_fallthru
          _
      $region32: #{tpu_custom_call.1} parent=5 // pred_fallthru
        _
      %p310 = scmp.le.s32.totalorder 2, %s16
      // Predicated region
      $region45: #{tpu_custom_call.1} parent=5 // pred_check
        %p311 = pneg %p310
      $region46: #{tpu_custom_call.1} parent=5 // pred_check_branch
        %313 = sbr.rel (%p311) target = $region48
      $region47: #{tpu_custom_call.1} parent=5 // pred_region
        %s314 = ssub.s32 %s16, 2
        // Predicated region
        $region49: #{tpu_custom_call.1} parent=47 // pred_check
          %p315 = pneg %p129
        $region50: #{tpu_custom_call.1} parent=47 // pred_check_branch
          %317 = sbr.rel (%p315) target = $region52
        $region51: #{tpu_custom_call.1} parent=47 // pred_region
          %s318 = sand.u32 %s114, 1
          %s319 = scalar_lea.sflag [#allocation4], %s318
          %s320 = sand.u32 %s114, 1
          %s321 = smul.addr %s320, 4
          %s322 = scalar_lea.vmem [#allocation7], %s321
          %323 = dma.done %s319, 64
        $region52: #{tpu_custom_call.1} parent=47 // pred_fallthru
          _
      $region48: #{tpu_custom_call.1} parent=5 // pred_fallthru
        _
    $region6: #{tpu_custom_call.1} parent=1 // loop_footer
      %s20 = sadd.s32 1, %s16
    $region7: #{tpu_custom_call.1} parent=1 // loop_footer_branch
      %15 = sbr.rel target = $region3
    $region8: #{tpu_custom_call.1} parent=1 // loop_exit
      _
    %324 = vsyncpa [#allocation3], 1
    %s325 = scalar_lea.sflag [#allocation3], 1
    %326 = vsyncpa %s325, 1
    %327 = vsyncpa [#allocation6], 1
    %328 = vsyncpa [#allocation4], 1
    %s329 = scalar_lea.sflag [#allocation4], 1
    %330 = vsyncpa %s329, 1

</llo_original>
